<compile_context>
chip_gen: v7x
topology: tpu7x:2x2x1
jax: 0.10.0
libtpu: 0.0.40
codegen_flags: <defaults>
</compile_context>

<pallas_src>
import jax
import jax.numpy as jnp
from jax.experimental import pallas as pl
from jax.experimental.pallas import tpu as pltpu  # noqa: F401

# Small synthetic sizes consistent with the module's structure.
X_SIZE = 16
H1 = 32
H2 = 128
Z_SIZE = 8
BATCH = 8
BN_EPS = 1e-5
LEAKY_SLOPE = 0.01

# Fused ("mu | logvar") widths.
H1F = 2 * H1        # 64
H2F = 2 * H2        # 256
ZF = 2 * Z_SIZE     # 16

# Packed parameter-blob row layout (blob is (BLOB_ROWS, 256) f32).
ROW_W1 = 0                     # rows [  0,  16): W1 fused (16, 64) in lanes 0:64
ROW_W2 = ROW_W1 + X_SIZE       # rows [ 16,  80): W2 fused block-diag (64, 256)
ROW_W3 = ROW_W2 + H1F          # rows [ 80, 336): W3 fused block-diag, natural orient, lanes 0:16
ROW_VEC = ROW_W3 + H2F         # rows [336, 344): g1, b1, g2, b2, bias3, zero-pad
BLOB_ROWS = ROW_VEC + 8        # 344

IN_W = 128                     # lane-dense packed input : [x (16) | eps (8) | zeros]
OUT_W = 128                    # lane-dense packed output: [z (8) | mu (8) | sigma (8) | zeros]


def _leaky_relu(x):
    return jnp.maximum(x, LEAKY_SLOPE * x)


def _bn_leaky(h, gamma, beta):
    """Training-mode BatchNorm1d folded into scale/shift, then LeakyReLU(0.01).

    sum(h) and sum(h*h) come from a single batch-axis reduction of the
    lane-concatenated [h | h*h] slab.
    """
    n = h.shape[1]
    inv_b = 1.0 / h.shape[0]
    s = jnp.sum(jnp.concatenate([h, h * h], axis=1), axis=0, keepdims=True)  # (1, 2n)
    mean = s[:, :n] * inv_b
    mean_sq = s[:, n:] * inv_b
    # TODO(synk): one-pass variance (E[h^2]-E[h]^2) is slightly less stable than
    # PyTorch's two-pass computation; fine at these scales / tolerances.
    var = jnp.maximum(mean_sq - mean * mean, 0.0)
    scale = gamma * jax.lax.rsqrt(var + BN_EPS)
    shift = beta - mean * scale
    a = h * scale + shift
    return jnp.maximum(a, LEAKY_SLOPE * a)


def vae_e_kernel(in_ref, params_ref, out_ref):
    inp = in_ref[...]                                    # (B, 128) = [x | eps | 0]
    x = inp[:, :X_SIZE]                                  # (B, 16)
    eps = inp[:, X_SIZE:X_SIZE + Z_SIZE]                 # (B, 8)

    # Tile-aligned static row slices of the packed parameter blob (row starts
    # are multiples of 8, full 256-lane width).
    w1 = params_ref[pl.ds(ROW_W1, X_SIZE), :][:, :H1F]   # (16, 64)  fused [mu|lv]
    w2 = params_ref[pl.ds(ROW_W2, H1F), :]               # (64, 256) block-diag
    w3 = params_ref[pl.ds(ROW_W3, H2F), :]               # (256, 256) block-diag in lanes 0:16
    vecs = params_ref[pl.ds(ROW_VEC, 8), :]              # (8, 256)
    g1 = vecs[0:1, :H1F]
    b1 = vecs[1:2, :H1F]
    g2 = vecs[2:3, :]
    b2 = vecs[3:4, :]
    bias3 = vecs[4:5, :ZF]

    # Fused mu / log-variance branches: one matmul chain on the MXU.
    h = jnp.dot(x, w1, preferred_element_type=jnp.float32)        # (B, 64)
    h = _bn_leaky(h, g1, b1)
    h = jnp.dot(h, w2, preferred_element_type=jnp.float32)        # (B, 256)
    h = _bn_leaky(h, g2, b2)
    out3 = jnp.dot(h, w3, preferred_element_type=jnp.float32)[:, :ZF] + bias3  # (B, 16)

    mu = out3[:, :Z_SIZE]
    log_variance = out3[:, Z_SIZE:]
    sigma = jnp.exp(0.5 * log_variance)
    z = eps * sigma + mu

    # Single lane-dense full-width store: [z | mu | sigma | zeros].
    pad = jnp.zeros((z.shape[0], OUT_W - 3 * Z_SIZE), jnp.float32)
    out_ref[...] = jnp.concatenate([z, mu, sigma, pad], axis=1)


def _full_spec(shape):
    # Whole array as a single block (tiny problem; everything fits in VMEM).
    return pl.BlockSpec(shape, lambda: tuple(0 for _ in shape))


@jax.jit
def vae_e_forward(x, epsilon, param_blob):
    """x: (B, X_SIZE), epsilon: (B, Z_SIZE), param_blob: (BLOB_ROWS, 256)."""
    B = x.shape[0]
    # One lane-dense packed input slab -> one input DMA, one full-width load.
    inp = jnp.concatenate(
        [x, epsilon, jnp.zeros((B, IN_W - X_SIZE - Z_SIZE), jnp.float32)], axis=1)

    packed = pl.pallas_call(
        vae_e_kernel,
        out_shape=jax.ShapeDtypeStruct((B, OUT_W), jnp.float32),
        grid=(),
        in_specs=[
            _full_spec((B, IN_W)),
            _full_spec(param_blob.shape),
        ],
        out_specs=_full_spec((B, OUT_W)),
    )(inp, param_blob)

    z = packed[:, 0:Z_SIZE]
    mu = packed[:, Z_SIZE:2 * Z_SIZE]
    sigma = packed[:, 2 * Z_SIZE:3 * Z_SIZE]
    return z, mu, sigma


def init_params(key):
    """Deterministic synthetic init (stand-in for src.utils.init_weights)."""
    keys = jax.random.split(key, 8)

    def lin(k, fan_in, fan_out):
        # Kaiming-ish uniform, stored as (in, out) for x @ W.
        bound = 1.0 / jnp.sqrt(fan_in)
        return jax.random.uniform(k, (fan_in, fan_out), jnp.float32, -bound, bound)

    def bn(n):
        # BatchNorm1d default init: gamma=1, beta=0; stored as (1, n) rows.
        return jnp.ones((1, n), jnp.float32), jnp.zeros((1, n), jnp.float32)

    mu_g1, mu_b1 = bn(H1)
    mu_g2, mu_b2 = bn(H2)
    lv_g1, lv_b1 = bn(H1)
    lv_g2, lv_b2 = bn(H2)

    b3_bound = 1.0 / jnp.sqrt(H2)
    return dict(
        mu_w1=lin(keys[0], X_SIZE, H1), mu_g1=mu_g1, mu_b1=mu_b1,
        mu_w2=lin(keys[1], H1, H2), mu_g2=mu_g2, mu_b2=mu_b2,
        mu_w3=lin(keys[2], H2, Z_SIZE),
        mu_bias3=jax.random.uniform(keys[3], (1, Z_SIZE), jnp.float32, -b3_bound, b3_bound),
        lv_w1=lin(keys[4], X_SIZE, H1), lv_g1=lv_g1, lv_b1=lv_b1,
        lv_w2=lin(keys[5], H1, H2), lv_g2=lv_g2, lv_b2=lv_b2,
        lv_w3=lin(keys[6], H2, Z_SIZE),
        lv_bias3=jax.random.uniform(keys[7], (1, Z_SIZE), jnp.float32, -b3_bound, b3_bound),
    )


def pack_params(params):
    """Pack the 16 per-branch parameter arrays into one (344, 256) f32 blob."""
    f32 = jnp.float32

    # Layer 1: concatenate along outputs -> (16, 64), pad lanes to 256.
    w1f = jnp.concatenate([params["mu_w1"], params["lv_w1"]], axis=1)
    w1_rows = jnp.pad(w1f, ((0, 0), (0, H2F - H1F)))                      # (16, 256)

    # Layer 2: block-diagonal (64, 256).
    w2f = jnp.zeros((H1F, H2F), f32)
    w2f = w2f.at[:H1, :H2].set(params["mu_w2"]).at[H1:, H2:].set(params["lv_w2"])

    # Layer 3: natural (K=256, N) orientation (no rhs-transposed dot in-kernel),
    # block-diagonal in lanes 0:16, zero-padded to the 256-lane blob width.
    w3_rows = jnp.zeros((H2F, H2F), f32)
    w3_rows = w3_rows.at[:H2, :Z_SIZE].set(params["mu_w3"])
    w3_rows = w3_rows.at[H2:, Z_SIZE:ZF].set(params["lv_w3"])             # (256, 256)

    def row(a, b):
        v = jnp.concatenate([a, b], axis=1)
        return jnp.pad(v, ((0, 0), (0, H2F - v.shape[1])))

    vec_rows = jnp.concatenate(
        [
            row(params["mu_g1"], params["lv_g1"]),
            row(params["mu_b1"], params["lv_b1"]),
            row(params["mu_g2"], params["lv_g2"]),
            row(params["mu_b2"], params["lv_b2"]),
            row(params["mu_bias3"], params["lv_bias3"]),
            jnp.zeros((3, H2F), f32),
        ],
        axis=0,
    )                                                                     # (8, 256)

    blob = jnp.concatenate([w1_rows, w2f, w3_rows, vec_rows], axis=0)     # (344, 256)
    assert blob.shape == (BLOB_ROWS, H2F)
    return blob.astype(f32)


def reference_forward(x, epsilon, params):
    """Pure-JAX reference of the PyTorch forward (unfused, two-pass BN stats)."""

    def bn_ref(h, gamma, beta):
        mean = jnp.mean(h, axis=0, keepdims=True)
        var = jnp.mean((h - mean) ** 2, axis=0, keepdims=True)
        return (h - mean) / jnp.sqrt(var + BN_EPS) * gamma + beta

    def branch(pfx):
        h = x @ params[f"{pfx}_w1"]
        h = _leaky_relu(bn_ref(h, params[f"{pfx}_g1"], params[f"{pfx}_b1"]))
        h = h @ params[f"{pfx}_w2"]
        h = _leaky_relu(bn_ref(h, params[f"{pfx}_g2"], params[f"{pfx}_b2"]))
        return h @ params[f"{pfx}_w3"] + params[f"{pfx}_bias3"]

    mu = branch("mu")
    logvar = branch("lv")
    sigma = jnp.exp(0.5 * logvar)
    z = epsilon * sigma + mu
    return z, mu, sigma


if __name__ == "__main__":
    key = jax.random.PRNGKey(0)
    k_param, k_x, k_eps = jax.random.split(key, 3)

    params = init_params(k_param)
    param_blob = pack_params(params)

    x = jax.random.normal(k_x, (BATCH, X_SIZE), jnp.float32)
    # torch.randn_like(mu) -> standard-normal noise, generated outside kernel.
    epsilon = jax.random.normal(k_eps, (BATCH, Z_SIZE), jnp.float32)

    z, mu, sigma = vae_e_forward(x, epsilon, param_blob)
    jax.block_until_ready((z, mu, sigma))

    z_ref, mu_ref, sigma_ref = reference_forward(x, epsilon, params)
    assert jnp.allclose(z, z_ref, atol=1e-4, rtol=1e-4), "z mismatch"
    assert jnp.allclose(mu, mu_ref, atol=1e-4, rtol=1e-4), "mu mismatch"
    assert jnp.allclose(sigma, sigma_ref, atol=1e-4, rtol=1e-4), "sigma mismatch"

    print("KERNEL_OK")
</pallas_src>

<mosaic_0001>
module attributes {stable_mosaic.version = 11 : i64} {
  func.func @vae_e_kernel(%arg0: memref<8x128xf32, #tpu.memory_space<vmem>>, %arg1: memref<344x256xf32, #tpu.memory_space<vmem>>, %arg2: memref<8x128xf32, #tpu.memory_space<vmem>>) attributes {dimension_semantics = [], scalar_prefetch = 0 : i64, scratch_operands = 0 : i64, tpu.core_type = #tpu.core_type<tc>} {
    %c0 = arith.constant 0 : index
    %c0_0 = arith.constant 0 : index
    %0 = vector.load %arg0[%c0, %c0_0] : memref<8x128xf32, #tpu.memory_space<vmem>>, vector<8x128xf32>
    %1 = vector.extract_strided_slice %0 {offsets = [0, 0], sizes = [8, 16], strides = [1, 1]} : vector<8x128xf32> to vector<8x16xf32>
    %2 = vector.extract_strided_slice %0 {offsets = [0, 16], sizes = [8, 8], strides = [1, 1]} : vector<8x128xf32> to vector<8x8xf32>
    %c0_1 = arith.constant 0 : index
    %c0_2 = arith.constant 0 : index
    %3 = vector.load %arg1[%c0_1, %c0_2] : memref<344x256xf32, #tpu.memory_space<vmem>>, vector<16x256xf32>
    %4 = vector.extract_strided_slice %3 {offsets = [0, 0], sizes = [16, 64], strides = [1, 1]} : vector<16x256xf32> to vector<16x64xf32>
    %c16 = arith.constant 16 : index
    %c0_3 = arith.constant 0 : index
    %5 = vector.load %arg1[%c16, %c0_3] : memref<344x256xf32, #tpu.memory_space<vmem>>, vector<64x256xf32>
    %c80 = arith.constant 80 : index
    %c0_4 = arith.constant 0 : index
    %6 = vector.load %arg1[%c80, %c0_4] : memref<344x256xf32, #tpu.memory_space<vmem>>, vector<256x256xf32>
    %c336 = arith.constant 336 : index
    %c0_5 = arith.constant 0 : index
    %7 = vector.load %arg1[%c336, %c0_5] : memref<344x256xf32, #tpu.memory_space<vmem>>, vector<8x256xf32>
    %8 = vector.extract_strided_slice %7 {offsets = [0, 0], sizes = [1, 64], strides = [1, 1]} : vector<8x256xf32> to vector<1x64xf32>
    %9 = vector.extract_strided_slice %7 {offsets = [1, 0], sizes = [1, 64], strides = [1, 1]} : vector<8x256xf32> to vector<1x64xf32>
    %10 = vector.extract_strided_slice %7 {offsets = [2, 0], sizes = [1, 256], strides = [1, 1]} : vector<8x256xf32> to vector<1x256xf32>
    %11 = vector.extract_strided_slice %7 {offsets = [3, 0], sizes = [1, 256], strides = [1, 1]} : vector<8x256xf32> to vector<1x256xf32>
    %12 = vector.extract_strided_slice %7 {offsets = [4, 0], sizes = [1, 16], strides = [1, 1]} : vector<8x256xf32> to vector<1x16xf32>
    %cst = arith.constant dense<0.000000e+00> : vector<8x64xf32>
    %13 = tpu.matmul %1, %4, %cst {dimension_numbers = #tpu.dot_dimension_numbers<[1], [0], [0], [1], [0, 0, 1, 1], [], []>} : vector<8x16xf32>, vector<16x64xf32>, vector<8x64xf32> -> vector<8x64xf32>
    %14 = arith.mulf %13, %13 : vector<8x64xf32>
    %15 = tpu.concatenate %13, %14 in 1 : vector<8x64xf32>, vector<8x64xf32> -> vector<8x128xf32>
    %cst_6 = arith.constant dense<0.000000e+00> : vector<128xf32>
    %16 = vector.multi_reduction <add>, %15, %cst_6 [0] : vector<8x128xf32> to vector<128xf32>
    %17 = vector.shape_cast %16 : vector<128xf32> to vector<1x128xf32>
    %18 = vector.extract_strided_slice %17 {offsets = [0, 0], sizes = [1, 64], strides = [1, 1]} : vector<1x128xf32> to vector<1x64xf32>
    %cst_7 = arith.constant 1.250000e-01 : f32
    %19 = vector.broadcast %cst_7 : f32 to vector<1x64xf32>
    %20 = arith.mulf %18, %19 : vector<1x64xf32>
    %21 = vector.extract_strided_slice %17 {offsets = [0, 64], sizes = [1, 64], strides = [1, 1]} : vector<1x128xf32> to vector<1x64xf32>
    %cst_8 = arith.constant 1.250000e-01 : f32
    %22 = vector.broadcast %cst_8 : f32 to vector<1x64xf32>
    %23 = arith.mulf %21, %22 : vector<1x64xf32>
    %24 = arith.mulf %20, %20 : vector<1x64xf32>
    %25 = arith.subf %23, %24 : vector<1x64xf32>
    %cst_9 = arith.constant 0.000000e+00 : f32
    %26 = vector.broadcast %cst_9 : f32 to vector<1x64xf32>
    %27 = arith.maximumf %25, %26 : vector<1x64xf32>
    %cst_10 = arith.constant 9.99999974E-6 : f32
    %28 = vector.broadcast %cst_10 : f32 to vector<1x64xf32>
    %29 = arith.addf %27, %28 : vector<1x64xf32>
    %30 = math.rsqrt %29 : vector<1x64xf32>
    %31 = arith.mulf %8, %30 : vector<1x64xf32>
    %32 = arith.mulf %20, %31 : vector<1x64xf32>
    %33 = arith.subf %9, %32 : vector<1x64xf32>
    %34 = vector.broadcast %31 : vector<1x64xf32> to vector<8x64xf32>
    %35 = arith.mulf %13, %34 : vector<8x64xf32>
    %36 = vector.broadcast %33 : vector<1x64xf32> to vector<8x64xf32>
    %37 = arith.addf %35, %36 : vector<8x64xf32>
    %cst_11 = arith.constant 0.00999999977 : f32
    %38 = vector.broadcast %cst_11 : f32 to vector<8x64xf32>
    %39 = arith.mulf %38, %37 : vector<8x64xf32>
    %40 = arith.maximumf %37, %39 : vector<8x64xf32>
    %cst_12 = arith.constant dense<0.000000e+00> : vector<8x256xf32>
    %41 = tpu.matmul %40, %5, %cst_12 {dimension_numbers = #tpu.dot_dimension_numbers<[1], [0], [0], [1], [0, 0, 1, 1], [], []>} : vector<8x64xf32>, vector<64x256xf32>, vector<8x256xf32> -> vector<8x256xf32>
    %42 = arith.mulf %41, %41 : vector<8x256xf32>
    %43 = tpu.concatenate %41, %42 in 1 : vector<8x256xf32>, vector<8x256xf32> -> vector<8x512xf32>
    %cst_13 = arith.constant dense<0.000000e+00> : vector<512xf32>
    %44 = vector.multi_reduction <add>, %43, %cst_13 [0] : vector<8x512xf32> to vector<512xf32>
    %45 = vector.shape_cast %44 : vector<512xf32> to vector<1x512xf32>
    %46 = vector.extract_strided_slice %45 {offsets = [0, 0], sizes = [1, 256], strides = [1, 1]} : vector<1x512xf32> to vector<1x256xf32>
    %cst_14 = arith.constant 1.250000e-01 : f32
    %47 = vector.broadcast %cst_14 : f32 to vector<1x256xf32>
    %48 = arith.mulf %46, %47 : vector<1x256xf32>
    %49 = vector.extract_strided_slice %45 {offsets = [0, 256], sizes = [1, 256], strides = [1, 1]} : vector<1x512xf32> to vector<1x256xf32>
    %cst_15 = arith.constant 1.250000e-01 : f32
    %50 = vector.broadcast %cst_15 : f32 to vector<1x256xf32>
    %51 = arith.mulf %49, %50 : vector<1x256xf32>
    %52 = arith.mulf %48, %48 : vector<1x256xf32>
    %53 = arith.subf %51, %52 : vector<1x256xf32>
    %cst_16 = arith.constant 0.000000e+00 : f32
    %54 = vector.broadcast %cst_16 : f32 to vector<1x256xf32>
    %55 = arith.maximumf %53, %54 : vector<1x256xf32>
    %cst_17 = arith.constant 9.99999974E-6 : f32
    %56 = vector.broadcast %cst_17 : f32 to vector<1x256xf32>
    %57 = arith.addf %55, %56 : vector<1x256xf32>
    %58 = math.rsqrt %57 : vector<1x256xf32>
    %59 = arith.mulf %10, %58 : vector<1x256xf32>
    %60 = arith.mulf %48, %59 : vector<1x256xf32>
    %61 = arith.subf %11, %60 : vector<1x256xf32>
    %62 = vector.broadcast %59 : vector<1x256xf32> to vector<8x256xf32>
    %63 = arith.mulf %41, %62 : vector<8x256xf32>
    %64 = vector.broadcast %61 : vector<1x256xf32> to vector<8x256xf32>
    %65 = arith.addf %63, %64 : vector<8x256xf32>
    %cst_18 = arith.constant 0.00999999977 : f32
    %66 = vector.broadcast %cst_18 : f32 to vector<8x256xf32>
    %67 = arith.mulf %66, %65 : vector<8x256xf32>
    %68 = arith.maximumf %65, %67 : vector<8x256xf32>
    %cst_19 = arith.constant dense<0.000000e+00> : vector<8x256xf32>
    %69 = tpu.matmul %68, %6, %cst_19 {dimension_numbers = #tpu.dot_dimension_numbers<[1], [0], [0], [1], [0, 0, 1, 1], [], []>} : vector<8x256xf32>, vector<256x256xf32>, vector<8x256xf32> -> vector<8x256xf32>
    %70 = vector.extract_strided_slice %69 {offsets = [0, 0], sizes = [8, 16], strides = [1, 1]} : vector<8x256xf32> to vector<8x16xf32>
    %71 = vector.broadcast %12 : vector<1x16xf32> to vector<8x16xf32>
    %72 = arith.addf %70, %71 : vector<8x16xf32>
    %73 = vector.extract_strided_slice %72 {offsets = [0, 0], sizes = [8, 8], strides = [1, 1]} : vector<8x16xf32> to vector<8x8xf32>
    %74 = vector.extract_strided_slice %72 {offsets = [0, 8], sizes = [8, 8], strides = [1, 1]} : vector<8x16xf32> to vector<8x8xf32>
    %cst_20 = arith.constant 5.000000e-01 : f32
    %75 = vector.broadcast %cst_20 : f32 to vector<8x8xf32>
    %76 = arith.mulf %75, %74 : vector<8x8xf32>
    %77 = math.exp %76 : vector<8x8xf32>
    %78 = arith.mulf %2, %77 : vector<8x8xf32>
    %79 = arith.addf %78, %73 : vector<8x8xf32>
    %cst_21 = arith.constant 0.000000e+00 : f32
    %80 = vector.broadcast %cst_21 : f32 to vector<8x104xf32>
    %81 = tpu.concatenate %79, %73, %77, %80 in 1 : vector<8x8xf32>, vector<8x8xf32>, vector<8x8xf32>, vector<8x104xf32> -> vector<8x128xf32>
    %c0_22 = arith.constant 0 : index
    %c0_23 = arith.constant 0 : index
    %82 = vector.load %arg2[%c0_22, %c0_23] : memref<8x128xf32, #tpu.memory_space<vmem>>, vector<8x128xf32>
    tpu.vector_store %arg2[%c0_22, %c0_23], %81 {strides = array<i32>} : memref<8x128xf32, #tpu.memory_space<vmem>>, vector<8x128xf32>,
    return
  }
}

</mosaic_0001>

<llo_original>
// kernel: vae_e_forward.1
$region0: #{vae_e_forward.1}
  #allocation0 [shape = 'u32[]', space=smem, size = 0x4, offset = 0x4, fixed_abs, tag = 'smem constant byte address 0x4 - core index']
  #allocation1 [shape = 'u32[144,128]{1,0:T(1,128)}', space=vmem, size = 0x12000, scoped, tag = 'internal scratch']
  %s0 = inlined_call_operand.vmem [shape: f32[8,128], index: 0, kind: input, shape index: {}]
  %s1 = inlined_call_operand.hbm [shape: f32[344,256], index: 1, kind: input, shape index: {}]
  %s2 = inlined_call_operand.vmem [shape: f32[8,128], index: 2, kind: output, shape index: {}]
  %s3 = sld [smem:[#allocation0]]
  $region22: #{vae_e_forward.1} parent=0
    _
  %s5 = ssub.s32 1, %s3
  %s6 = scalar_select 0, %s5, %s3
  $region1: #{vae_e_forward.1} parent=0
    #allocation2 [shape = 'u8[352256]{0}', space=vmem, size = 0x56000, scoped, tag = 'input window, operand 1, single buffered']
    #allocation3 [shape = 's32[1]{0}', space=sflag, size = 0x4, scoped, tag = 'scoped memory for vae_e_forward.1']
    %7 = vsyncpa [#allocation3], 0
    // Predicated region
    $region2: #{vae_e_forward.1} parent=1 // pred_check
      _
    $region3: #{vae_e_forward.1} parent=1 // pred_check_branch
      %9 = sbr.rel (0) target = $region5
    $region4: #{vae_e_forward.1} parent=1 // pred_region
      _
    $region5: #{vae_e_forward.1} parent=1 // pred_fallthru
      _
    // Predicated region
    $region6: #{vae_e_forward.1} parent=1 // pred_check
      _
    $region7: #{vae_e_forward.1} parent=1 // pred_check_branch
      %11 = sbr.rel (0) target = $region9
    $region8: #{vae_e_forward.1} parent=1 // pred_region
      %s13 = ssub.s32 11008, 11008
      %14 = vsyncadd [#allocation3], %s13
      %s15 = sshll.u32 [#allocation2], 4
      %s16 = int_to_ptr.vmem [resolvable:$true] %s15
      %21 = dma.hbm_to_vmem [thread:$0]  %s1, 11008, %s16, [#allocation3], 256, 256, 16
    $region9: #{vae_e_forward.1} parent=1 // pred_fallthru
      _
    // Predicated region
    $region10: #{vae_e_forward.1} parent=1 // pred_check
      _
    $region11: #{vae_e_forward.1} parent=1 // pred_check_branch
      %23 = sbr.rel (0) target = $region13
    $region12: #{vae_e_forward.1} parent=1 // pred_region
      %24 = dma.done [#allocation3], 11008
    $region13: #{vae_e_forward.1} parent=1 // pred_fallthru
      _
    %v25 = vld [vmem:[%s0] sm:$0xff]
    %v26 = vld [vmem:[#allocation2] sm:$0xff]
    %v27 = vld [vmem:[#allocation2 + $0x10] sm:$0xff]
    %v28 = vld [vmem:[#allocation2 + $0x20] sm:$0xff]
    %v29 = vld [vmem:[#allocation2 + $0x28] sm:$0xff]
    %v30 = vld [vmem:[#allocation2 + $0x30] sm:$0xff]
    %v31 = vld [vmem:[#allocation2 + $0x38] sm:$0xff]
    %v32 = vld [vmem:[#allocation2 + $0x40] sm:$0xff]
    %v33 = vld [vmem:[#allocation2 + $0x48] sm:$0xff]
    %v34 = vld [vmem:[#allocation2 + $0x50] sm:$0xff]
    %v35 = vld [vmem:[#allocation2 + $0x58] sm:$0xff]
    %v36 = vld [vmem:[#allocation2 + $0x60] sm:$0xff]
    %v37 = vld [vmem:[#allocation2 + $0x68] sm:$0xff]
    %v38 = vld [vmem:[#allocation2 + $0x70] sm:$0xff]
    %v39 = vld [vmem:[#allocation2 + $0x78] sm:$0xff]
    %v40 = vld [vmem:[#allocation2 + $0x80] sm:$0xff]
    %v41 = vld [vmem:[#allocation2 + $0x88] sm:$0xff]
    %v42 = vld [vmem:[#allocation2 + $0x90] sm:$0xff]
    %v43 = vld [vmem:[#allocation2 + $0x98] sm:$0xff]
    %v44 = vld [vmem:[#allocation2 + $0xa0] sm:$0xff]
    %v45 = vld [vmem:[#allocation2 + $0xa8] sm:$0xff]
    %v46 = vld [vmem:[#allocation2 + $0xb0] sm:$0xff]
    %v47 = vld [vmem:[#allocation2 + $0xb8] sm:$0xff]
    %v48 = vld [vmem:[#allocation2 + $0xc0] sm:$0xff]
    %v49 = vld [vmem:[#allocation2 + $0xc8] sm:$0xff]
    %v50 = vld [vmem:[#allocation2 + $0xd0] sm:$0xff]
    %v51 = vld [vmem:[#allocation2 + $0xd8] sm:$0xff]
    %v52 = vld [vmem:[#allocation2 + $0xe0] sm:$0xff]
    %v53 = vld [vmem:[#allocation2 + $0xe8] sm:$0xff]
    %v54 = vld [vmem:[#allocation2 + $0xf0] sm:$0xff]
    %v55 = vld [vmem:[#allocation2 + $0xf8] sm:$0xff]
    %v56 = vld [vmem:[#allocation2 + $0x100] sm:$0xff]
    %v57 = vld [vmem:[#allocation2 + $0x108] sm:$0xff]
    %v58 = vld [vmem:[#allocation2 + $0x110] sm:$0xff]
    %v59 = vld [vmem:[#allocation2 + $0x118] sm:$0xff]
    %v60 = vld [vmem:[#allocation2 + $0x120] sm:$0xff]
    %v61 = vld [vmem:[#allocation2 + $0x128] sm:$0xff]
    %v62 = vld [vmem:[#allocation2 + $0x130] sm:$0xff]
    %v63 = vld [vmem:[#allocation2 + $0x138] sm:$0xff]
    %v64 = vld [vmem:[#allocation2 + $0x140] sm:$0xff]
    %v65 = vld [vmem:[#allocation2 + $0x148] sm:$0xff]
    %v66 = vld [vmem:[#allocation2 + $0x150] sm:$0xff]
    %v67 = vld [vmem:[#allocation2 + $0x158] sm:$0xff]
    %v68 = vld [vmem:[#allocation2 + $0x160] sm:$0xff]
    %v69 = vld [vmem:[#allocation2 + $0x168] sm:$0xff]
    %v70 = vld [vmem:[#allocation2 + $0x170] sm:$0xff]
    %v71 = vld [vmem:[#allocation2 + $0x178] sm:$0xff]
    %v72 = vld [vmem:[#allocation2 + $0x180] sm:$0xff]
    %v73 = vld [vmem:[#allocation2 + $0x188] sm:$0xff]
    %v74 = vld [vmem:[#allocation2 + $0x190] sm:$0xff]
    %v75 = vld [vmem:[#allocation2 + $0x198] sm:$0xff]
    %v76 = vld [vmem:[#allocation2 + $0x1a0] sm:$0xff]
    %v77 = vld [vmem:[#allocation2 + $0x1a8] sm:$0xff]
    %v78 = vld [vmem:[#allocation2 + $0x1b0] sm:$0xff]
    %v79 = vld [vmem:[#allocation2 + $0x1b8] sm:$0xff]
    %v80 = vld [vmem:[#allocation2 + $0x1c0] sm:$0xff]
    %v81 = vld [vmem:[#allocation2 + $0x1c8] sm:$0xff]
    %v82 = vld [vmem:[#allocation2 + $0x1d0] sm:$0xff]
    %v83 = vld [vmem:[#allocation2 + $0x1d8] sm:$0xff]
    %v84 = vld [vmem:[#allocation2 + $0x1e0] sm:$0xff]
    %v85 = vld [vmem:[#allocation2 + $0x1e8] sm:$0xff]
    %v86 = vld [vmem:[#allocation2 + $0x1f0] sm:$0xff]
    %v87 = vld [vmem:[#allocation2 + $0x1f8] sm:$0xff]
    %v88 = vld [vmem:[#allocation2 + $0x200] sm:$0xff]
    %v89 = vld [vmem:[#allocation2 + $0x208] sm:$0xff]
    %v90 = vld [vmem:[#allocation2 + $0x210] sm:$0xff]
    %v91 = vld [vmem:[#allocation2 + $0x218] sm:$0xff]
    %v92 = vld [vmem:[#allocation2 + $0x220] sm:$0xff]
    %v93 = vld [vmem:[#allocation2 + $0x228] sm:$0xff]
    %v94 = vld [vmem:[#allocation2 + $0x230] sm:$0xff]
    %v95 = vld [vmem:[#allocation2 + $0x238] sm:$0xff]
    %v96 = vld [vmem:[#allocation2 + $0x240] sm:$0xff]
    %v97 = vld [vmem:[#allocation2 + $0x248] sm:$0xff]
    %v98 = vld [vmem:[#allocation2 + $0x250] sm:$0xff]
    %v99 = vld [vmem:[#allocation2 + $0x258] sm:$0xff]
    %v100 = vld [vmem:[#allocation2 + $0x260] sm:$0xff]
    %v101 = vld [vmem:[#allocation2 + $0x268] sm:$0xff]
    %v102 = vld [vmem:[#allocation2 + $0x270] sm:$0xff]
    %v103 = vld [vmem:[#allocation2 + $0x278] sm:$0xff]
    %v104 = vld [vmem:[#allocation2 + $0x280] sm:$0xff]
    %v105 = vld [vmem:[#allocation2 + $0x288] sm:$0xff]
    %v106 = vld [vmem:[#allocation2 + $0x290] sm:$0xff]
    %v107 = vld [vmem:[#allocation2 + $0x298] sm:$0xff]
    %v108 = vld [vmem:[#allocation2 + $0x2a0] sm:$0xff]
    %v109 = vld [vmem:[#allocation2 + $0x2a8] sm:$0xff]
    %vm110 = vcmask 130048
    %v112 = vsel %vm110, %v25, 0
    %114 = vmatprep.subr.mxu0 0.0
    %115 = vmatpush1.msra.mxu0 %v26
    %116 = vmatprep.subr.mxu0 0.0
    %117 = vmatpush1.msra.mxu0 %v27
    %118 = vmatprep.subr.mxu0 0.0
    %119 = vmatpush1.msra.mxu0 0.0
    %120 = vmatprep.subr.mxu0 0.0
    %121 = vmatpush1.msra.mxu0 0.0
    %122 = vmatprep.subr.mxu0 0.0
    %123 = vmatpush1.msra.mxu0 0.0
    %124 = vmatprep.subr.mxu0 0.0
    %125 = vmatpush1.msra.mxu0 0.0
    %126 = vmatprep.subr.mxu0 0.0
    %127 = vmatpush1.msra.mxu0 0.0
    %128 = vmatprep.subr.mxu0 0.0
    %129 = vmatpush1.msra.mxu0 0.0
    %130 = vmatprep.subr.mxu0 0.0
    %131 = vmatpush1.msra.mxu0 0.0
    %132 = vmatprep.subr.mxu0 0.0
    %133 = vmatpush1.msra.mxu0 0.0
    %134 = vmatprep.subr.mxu0 0.0
    %135 = vmatpush1.msra.mxu0 0.0
    %136 = vmatprep.subr.mxu0 0.0
    %137 = vmatpush1.msra.mxu0 0.0
    %138 = vmatprep.subr.mxu0 0.0
    %139 = vmatpush1.msra.mxu0 0.0
    %140 = vmatprep.subr.mxu0 0.0
    %141 = vmatpush1.msra.mxu0 0.0
    %142 = vmatprep.subr.mxu0 0.0
    %143 = vmatpush1.msra.mxu0 0.0
    %144 = vmatprep.subr.mxu0 0.0
    %145 = vmatpush1.msra.mxu0 0.0
    %146 = vmatprep.subr.mxu0 0.0
    %147 = vmatpush1.msra.mxu0 0.0
    %148 = vmatprep.subr.mxu0 0.0
    %149 = vmatpush1.msra.mxu0 0.0
    %150 = vmatprep.subr.mxu0 0.0
    %151 = vmatpush1.msra.mxu0 0.0
    %152 = vmatprep.subr.mxu0 0.0
    %153 = vmatpush1.msra.mxu0 0.0
    %154 = vmatprep.subr.mxu0 0.0
    %155 = vmatpush1.msra.mxu0 0.0
    %156 = vmatprep.subr.mxu0 0.0
    %157 = vmatpush1.msra.mxu0 0.0
    %158 = vmatprep.subr.mxu0 0.0
    %159 = vmatpush1.msra.mxu0 0.0
    %160 = vmatprep.subr.mxu0 0.0
    %161 = vmatpush1.msra.mxu0 0.0
    %162 = vmatprep.subr.mxu0 0.0
    %163 = vmatpush1.msra.mxu0 0.0
    %164 = vmatprep.subr.mxu0 0.0
    %165 = vmatpush1.msra.mxu0 0.0
    %166 = vmatprep.subr.mxu0 0.0
    %167 = vmatpush1.msra.mxu0 0.0
    %168 = vmatprep.subr.mxu0 0.0
    %169 = vmatpush1.msra.mxu0 0.0
    %170 = vmatprep.subr.mxu0 0.0
    %171 = vmatpush1.msra.mxu0 0.0
    %172 = vmatprep.subr.mxu0 0.0
    %173 = vmatpush1.msra.mxu0 0.0
    %174 = vmatprep.subr.mxu0 0.0
    %175 = vmatpush1.msra.mxu0 0.0
    %176 = vmatprep.subr.mxu0 0.0
    %177 = vmatpush1.msra.mxu0 0.0
    %178 = vmatprep.mubr.f32.mxu0 0.0
    %179 = vmatmul.mubr.f32.gmra.mrb[0].mxu0 %v112
    %v180 = vpop.f32.mrb[0].mxu0
    %v181 = vadd.f32 0.0, %v180
    %v182 = vpop.f32.mrb[0].mxu0
    %183 = vdwg.mxu0
    %v184 = vmul.f32 %v181, %v181
    %186 = vrot.lane.b32.xlu0 %v184, 64
    %v187 = vpop.permute.xlu0 %186
    %vm189 = vcmask 523264
    %v190 = vsel %vm189, %v181, %v187
    %v191 = vrot.slane %v190, 4
    %v192 = vadd.f32 %v190, %v191
    %v193 = vrot.slane %v192, 2
    %v194 = vadd.f32 %v192, %v193
    %v195 = vrot.slane %v194, 1
    %v196 = vadd.f32 %v194, %v195
    %v197 = vmul.f32 %v196, 0.125
    %v198 = vmul.f32 %v197, %v197
    %200 = vrot.lane.b32.xlu0 %v198, 64
    %v201 = vpop.permute.xlu0 %200
    %v203 = vsub.f32 %v197, %v201
    %v204 = vmax.f32 %v203, 0.0
    %v205 = vadd.f32 %v204, 1e-05
    %v206 = vrsqrt.pop %v205
    %208 = vrot.lane.b32.xlu0 %v206, 64
    %v209 = vpop.permute.xlu0 %208
    %v211 = vmul.f32 %v108, %v209
    %v212 = vmul.f32 %v197, %v211
    %v214 = vrot.slane %v212, 7
    %v216 = vsub.f32 %v108, %v214
    %v217 = vlaneseq
    %v218 = vshrl.u32 %v217, 7
    %v219 = vsub.s32 0, %v218
    %v220 = vrot.slane %v211, %v219
    %v221 = vmul.f32 %v181, %v220
    %v222 = vlaneseq
    %v223 = vshrl.u32 %v222, 7
    %v224 = vsub.s32 1, %v223
    %v225 = vrot.slane %v216, %v224
    %v226 = vadd.f32 %v221, %v225
    %v227 = vmul.f32 %v226, 0.01
    %v228 = vmax.f32 %v226, %v227
    %v230 = vsel %vm189, %v228, 0
    %232 = vmatprep.subr.mxu0 %v29
    %233 = vmatpush1.msra.mxu0 %v28
    %234 = vmatprep.subr.mxu0 %v31
    %235 = vmatpush1.msra.mxu0 %v30
    %236 = vmatprep.subr.mxu0 %v33
    %237 = vmatpush1.msra.mxu0 %v32
    %238 = vmatprep.subr.mxu0 %v35
    %239 = vmatpush1.msra.mxu0 %v34
    %240 = vmatprep.subr.mxu0 %v37
    %241 = vmatpush1.msra.mxu0 %v36
    %242 = vmatprep.subr.mxu0 %v39
    %243 = vmatpush1.msra.mxu0 %v38
    %244 = vmatprep.subr.mxu0 %v41
    %245 = vmatpush1.msra.mxu0 %v40
    %246 = vmatprep.subr.mxu0 %v43
    %247 = vmatpush1.msra.mxu0 %v42
    %248 = vmatprep.subr.mxu0 0.0
    %249 = vmatpush1.msra.mxu0 0.0
    %250 = vmatprep.subr.mxu0 0.0
    %251 = vmatpush1.msra.mxu0 0.0
    %252 = vmatprep.subr.mxu0 0.0
    %253 = vmatpush1.msra.mxu0 0.0
    %254 = vmatprep.subr.mxu0 0.0
    %255 = vmatpush1.msra.mxu0 0.0
    %256 = vmatprep.subr.mxu0 0.0
    %257 = vmatpush1.msra.mxu0 0.0
    %258 = vmatprep.subr.mxu0 0.0
    %259 = vmatpush1.msra.mxu0 0.0
    %260 = vmatprep.subr.mxu0 0.0
    %261 = vmatpush1.msra.mxu0 0.0
    %262 = vmatprep.subr.mxu0 0.0
    %263 = vmatpush1.msra.mxu0 0.0
    %264 = vmatprep.subr.mxu0 0.0
    %265 = vmatpush1.msra.mxu0 0.0
    %266 = vmatprep.subr.mxu0 0.0
    %267 = vmatpush1.msra.mxu0 0.0
    %268 = vmatprep.subr.mxu0 0.0
    %269 = vmatpush1.msra.mxu0 0.0
    %270 = vmatprep.subr.mxu0 0.0
    %271 = vmatpush1.msra.mxu0 0.0
    %272 = vmatprep.subr.mxu0 0.0
    %273 = vmatpush1.msra.mxu0 0.0
    %274 = vmatprep.subr.mxu0 0.0
    %275 = vmatpush1.msra.mxu0 0.0
    %276 = vmatprep.subr.mxu0 0.0
    %277 = vmatpush1.msra.mxu0 0.0
    %278 = vmatprep.subr.mxu0 0.0
    %279 = vmatpush1.msra.mxu0 0.0
    %280 = vmatprep.subr.mxu0 0.0
    %281 = vmatpush1.msra.mxu0 0.0
    %282 = vmatprep.subr.mxu0 0.0
    %283 = vmatpush1.msra.mxu0 0.0
    %284 = vmatprep.subr.mxu0 0.0
    %285 = vmatpush1.msra.mxu0 0.0
    %286 = vmatprep.subr.mxu0 0.0
    %287 = vmatpush1.msra.mxu0 0.0
    %288 = vmatprep.subr.mxu0 0.0
    %289 = vmatpush1.msra.mxu0 0.0
    %290 = vmatprep.subr.mxu0 0.0
    %291 = vmatpush1.msra.mxu0 0.0
    %292 = vmatprep.subr.mxu0 0.0
    %293 = vmatpush1.msra.mxu0 0.0
    %294 = vmatprep.subr.mxu0 0.0
    %295 = vmatpush1.msra.mxu0 0.0
    %296 = vmatprep.mubr.f32.mxu0 0.0
    %297 = vmatmul.mubr.f32.gmra.mrb[0].mxu0 %v230
    %v298 = vpop.f32.mrb[0].mxu0
    %v299 = vadd.f32 0.0, %v298
    %v300 = vpop.f32.mrb[0].mxu0
    %v301 = vadd.f32 0.0, %v300
    %302 = vdwg.mxu0
    %v303 = vmul.f32 %v299, %v299
    %v304 = vmul.f32 %v301, %v301
    %v305 = vrot.slane %v299, 4
    %v306 = vadd.f32 %v299, %v305
    %v307 = vrot.slane %v306, 2
    %v308 = vadd.f32 %v306, %v307
    %v309 = vrot.slane %v308, 1
    %v310 = vadd.f32 %v308, %v309
    %v311 = vrot.slane %v301, 4
    %v312 = vadd.f32 %v301, %v311
    %v313 = vrot.slane %v312, 2
    %v314 = vadd.f32 %v312, %v313
    %v315 = vrot.slane %v314, 1
    %v316 = vadd.f32 %v314, %v315
    %v317 = vrot.slane %v303, 4
    %v318 = vadd.f32 %v303, %v317
    %v319 = vrot.slane %v318, 2
    %v320 = vadd.f32 %v318, %v319
    %v321 = vrot.slane %v320, 1
    %v322 = vadd.f32 %v320, %v321
    %v323 = vrot.slane %v304, 4
    %v324 = vadd.f32 %v304, %v323
    %v325 = vrot.slane %v324, 2
    %v326 = vadd.f32 %v324, %v325
    %v327 = vrot.slane %v326, 1
    %v328 = vadd.f32 %v326, %v327
    %v329 = vmul.f32 %v310, 0.125
    %v330 = vmul.f32 %v316, 0.125
    %v331 = vmul.f32 %v322, 0.125
    %v332 = vmul.f32 %v328, 0.125
    %v333 = vmul.f32 %v329, %v329
    %v334 = vmul.f32 %v330, %v330
    %v335 = vsub.f32 %v331, %v333
    %v336 = vsub.f32 %v332, %v334
    %v337 = vmax.f32 %v335, 0.0
    %v338 = vmax.f32 %v336, 0.0
    %v339 = vadd.f32 %v337, 1e-05
    %v340 = vadd.f32 %v338, 1e-05
    %v341 = vrsqrt.pop %v339
    %v342 = vrsqrt.pop %v340
    %v343 = vmul.f32 %v108, %v341
    %v344 = vmul.f32 %v109, %v342
    %v345 = vmul.f32 %v329, %v343
    %v346 = vmul.f32 %v330, %v344
    %v349 = vrot.slane %v345, 7
    %v350 = vrot.slane %v346, 7
    %v353 = vsub.f32 %v108, %v349
    %v354 = vsub.f32 %v109, %v350
    %v355 = vlaneseq
    %v356 = vshrl.u32 %v355, 7
    %v357 = vsub.s32 2, %v356
    %v358 = vrot.slane %v343, %v357
    %v359 = vlaneseq
    %v360 = vshrl.u32 %v359, 7
    %v361 = vsub.s32 2, %v360
    %v362 = vrot.slane %v344, %v361
    %v363 = vmul.f32 %v299, %v358
    %v364 = vmul.f32 %v301, %v362
    %v365 = vlaneseq
    %v366 = vshrl.u32 %v365, 7
    %v367 = vsub.s32 3, %v366
    %v368 = vrot.slane %v353, %v367
    %v369 = vlaneseq
    %v370 = vshrl.u32 %v369, 7
    %v371 = vsub.s32 3, %v370
    %v372 = vrot.slane %v354, %v371
    %v373 = vadd.f32 %v363, %v368
    %v374 = vadd.f32 %v364, %v372
    %v375 = vmul.f32 %v373, 0.01
    %v376 = vmul.f32 %v374, 0.01
    %v377 = vmax.f32 %v373, %v375
    %v378 = vmax.f32 %v374, %v376
    %379 = vmatprep.subr.mxu0 %v45
    %380 = vmatpush1.msra.mxu0 %v44
    %381 = vmatprep.subr.mxu0 %v47
    %382 = vmatpush1.msra.mxu0 %v46
    %383 = vmatprep.subr.mxu0 %v49
    %384 = vmatpush1.msra.mxu0 %v48
    %385 = vmatprep.subr.mxu0 %v51
    %386 = vmatpush1.msra.mxu0 %v50
    %387 = vmatprep.subr.mxu0 %v53
    %388 = vmatpush1.msra.mxu0 %v52
    %389 = vmatprep.subr.mxu0 %v55
    %390 = vmatpush1.msra.mxu0 %v54
    %391 = vmatprep.subr.mxu0 %v57
    %392 = vmatpush1.msra.mxu0 %v56
    %393 = vmatprep.subr.mxu0 %v59
    %394 = vmatpush1.msra.mxu0 %v58
    %395 = vmatprep.subr.mxu0 %v61
    %396 = vmatpush1.msra.mxu0 %v60
    %397 = vmatprep.subr.mxu0 %v63
    %398 = vmatpush1.msra.mxu0 %v62
    %399 = vmatprep.subr.mxu0 %v65
    %400 = vmatpush1.msra.mxu0 %v64
    %401 = vmatprep.subr.mxu0 %v67
    %402 = vmatpush1.msra.mxu0 %v66
    %403 = vmatprep.subr.mxu0 %v69
    %404 = vmatpush1.msra.mxu0 %v68
    %405 = vmatprep.subr.mxu0 %v71
    %406 = vmatpush1.msra.mxu0 %v70
    %407 = vmatprep.subr.mxu0 %v73
    %408 = vmatpush1.msra.mxu0 %v72
    %409 = vmatprep.subr.mxu0 %v75
    %410 = vmatpush1.msra.mxu0 %v74
    %411 = vmatprep.subr.mxu0 %v77
    %412 = vmatpush1.msra.mxu0 %v76
    %413 = vmatprep.subr.mxu0 %v79
    %414 = vmatpush1.msra.mxu0 %v78
    %415 = vmatprep.subr.mxu0 %v81
    %416 = vmatpush1.msra.mxu0 %v80
    %417 = vmatprep.subr.mxu0 %v83
    %418 = vmatpush1.msra.mxu0 %v82
    %419 = vmatprep.subr.mxu0 %v85
    %420 = vmatpush1.msra.mxu0 %v84
    %421 = vmatprep.subr.mxu0 %v87
    %422 = vmatpush1.msra.mxu0 %v86
    %423 = vmatprep.subr.mxu0 %v89
    %424 = vmatpush1.msra.mxu0 %v88
    %425 = vmatprep.subr.mxu0 %v91
    %426 = vmatpush1.msra.mxu0 %v90
    %427 = vmatprep.subr.mxu0 %v93
    %428 = vmatpush1.msra.mxu0 %v92
    %429 = vmatprep.subr.mxu0 %v95
    %430 = vmatpush1.msra.mxu0 %v94
    %431 = vmatprep.subr.mxu0 %v97
    %432 = vmatpush1.msra.mxu0 %v96
    %433 = vmatprep.subr.mxu0 %v99
    %434 = vmatpush1.msra.mxu0 %v98
    %435 = vmatprep.subr.mxu0 %v101
    %436 = vmatpush1.msra.mxu0 %v100
    %437 = vmatprep.subr.mxu0 %v103
    %438 = vmatpush1.msra.mxu0 %v102
    %439 = vmatprep.subr.mxu0 %v105
    %440 = vmatpush1.msra.mxu0 %v104
    %441 = vmatprep.subr.mxu0 %v107
    %442 = vmatpush1.msra.mxu0 %v106
    %443 = vmatprep.mubr.f32.mxu0 %v378
    %444 = vmatmul.mubr.f32.gmra.mrb[0].mxu0 %v377
    %v445 = vpop.f32.mrb[0].mxu0
    %v446 = vadd.f32 0.0, %v445
    %v447 = vpop.f32.mrb[0].mxu0
    %448 = vdwg.mxu0
    %v449 = vlaneseq
    %v450 = vshrl.u32 %v449, 7
    %v451 = vsub.s32 4, %v450
    %v452 = vrot.slane %v108, %v451
    %v453 = vadd.f32 %v446, %v452
    %v454 = vmul.f32 %v453, 0.5
    %v455 = vmul.f32 %v454, 1.442695
    %v456 = vpow.pop %v455
    %458 = vrot.lane.b32.xlu0 %v456, 8
    %v459 = vpop.permute.xlu0 %458
    %v461 = vmul.f32 %v25, %v459
    %463 = vrot.lane.b32.xlu0 %v453, 16
    %v464 = vpop.permute.xlu0 %463
    %v466 = vadd.f32 %v461, %v464
    %468 = vrot.lane.b32.xlu0 %v466, 112
    %v469 = vpop.permute.xlu0 %468
    %471 = vrot.lane.b32.xlu0 %v453, 8
    %v472 = vpop.permute.xlu0 %471
    %vm474 = vcmask 64512
    %v475 = vsel %vm474, %v469, %v472
    %v476 = vsel %vm110, %v475, %v459
    %vm477 = vcmask 195584
    %v478 = vsel %vm477, %v476, 0.0
    %479 = vst [vmem:[%s2] sm:$0xff] %v478
    // Predicated region
    $region14: #{vae_e_forward.1} parent=1 // pred_check
      _
    $region15: #{vae_e_forward.1} parent=1 // pred_check_branch
      %481 = sbr.rel (0) target = $region17
    $region16: #{vae_e_forward.1} parent=1 // pred_region
      _
    $region17: #{vae_e_forward.1} parent=1 // pred_fallthru
      _
    // Predicated region
    $region18: #{vae_e_forward.1} parent=1 // pred_check
      _
    $region19: #{vae_e_forward.1} parent=1 // pred_check_branch
      %483 = sbr.rel (0) target = $region21
    $region20: #{vae_e_forward.1} parent=1 // pred_region
      _
    $region21: #{vae_e_forward.1} parent=1 // pred_fallthru
      _
    %484 = vsyncpa [#allocation3], 1

</llo_original>
